<compile_context>
chip_gen: v5e
topology: v5e:2x2
jax: 0.10.0
libtpu: 0.0.40
codegen_flags: <defaults>
</compile_context>

<pallas_src>
import functools
import numpy as np
import jax
import jax.numpy as jnp
from jax import lax
from jax.experimental import pallas as pl
from jax.experimental.pallas import tpu as pltpu


def _layer_norm(v, g, b, eps):
    # Annotated-Transformer LayerNorm: unbiased std, eps added to the std.
    d = v.shape[-1]
    mu = jnp.mean(v, axis=-1, keepdims=True)
    var = jnp.sum((v - mu) ** 2, axis=-1, keepdims=True) * (1.0 / (d - 1))
    return (v - mu) / (jnp.sqrt(var) + eps) * g + b


# ---------------------------------------------------------------------------
# Kernel A: LN1 + Q/K/V projections (computed once per token tile)
# ---------------------------------------------------------------------------
def qkv_proj_kernel(x_ref, wq_ref, bq_ref, wk_ref, bk_ref, wv_ref, bv_ref,
                    g1_ref, be1_ref, q_out, k_out, v_out, *, num_heads, eps):
    D = x_ref.shape[2]
    dk = D // num_heads
    scale = 1.0 / float(np.sqrt(dk))

    x = x_ref[0].astype(jnp.float32)                                   # (TP, D)
    xn = _layer_norm(x, g1_ref[...], be1_ref[...], eps).astype(jnp.bfloat16)

    q = jnp.dot(xn, wq_ref[...], preferred_element_type=jnp.float32) + bq_ref[...]
    q_out[0] = (q * scale).astype(jnp.bfloat16)                        # fold 1/sqrt(dk)
    k = jnp.dot(xn, wk_ref[...], preferred_element_type=jnp.float32) + bk_ref[...]
    k_out[0] = k.astype(jnp.bfloat16)
    v = jnp.dot(xn, wv_ref[...], preferred_element_type=jnp.float32) + bv_ref[...]
    v_out[0] = v.astype(jnp.bfloat16)


# ---------------------------------------------------------------------------
# Kernel B: flash attention (online softmax over KV tiles) + Wo + residual
# ---------------------------------------------------------------------------
def attn_kernel(x_ref, q_ref, k_ref, v_ref, wo_ref, bo_ref, x1_ref,
                m_sc, l_sc, acc_sc, *, num_heads):
    ki = pl.program_id(2)
    nk = pl.num_programs(2)
    TQ, D = q_ref.shape[1], q_ref.shape[2]
    dk = D // num_heads

    @pl.when(ki == 0)
    def _():
        m_sc[...] = jnp.full(m_sc.shape, -jnp.inf, jnp.float32)
        l_sc[...] = jnp.zeros(l_sc.shape, jnp.float32)
        acc_sc[...] = jnp.zeros(acc_sc.shape, jnp.float32)

    q = q_ref[0]          # (TQ, D)  bf16, pre-scaled by 1/sqrt(dk)
    k = k_ref[0]          # (TKV, D) bf16
    v = v_ref[0]          # (TKV, D) bf16

    # TODO(synk): for many heads / dk >= 128 switch to lax.fori_loop over heads and
    # pad dk to a multiple of 128 so the per-head lane slices are free; a static
    # unroll with small dk is fine at these shapes.
    for h in range(num_heads):
        lo, hi = h * dk, (h + 1) * dk
        s = lax.dot_general(q[:, lo:hi], k[:, lo:hi], (((1,), (1,)), ((), ())),
                            preferred_element_type=jnp.float32)       # (TQ, TKV)

        # m/l live as dk-wide slabs (all lanes equal) -> lane-dense stores instead
        # of single-lane masked column stores.
        m_prev = jnp.max(m_sc[:, lo:hi], axis=-1, keepdims=True)      # (TQ, 1)
        l_prev = jnp.max(l_sc[:, lo:hi], axis=-1, keepdims=True)
        m_new = jnp.maximum(m_prev, jnp.max(s, axis=-1, keepdims=True))
        alpha = jnp.exp(m_prev - m_new)
        # TODO(synk): bf16 exp on v6e/v7x roughly doubles EUP throughput; kept f32
        # so the same kernel stays v5e-safe and closer to the f32 reference.
        p = jnp.exp(s - m_new)
        l_new = alpha * l_prev + jnp.sum(p, axis=-1, keepdims=True)

        acc_sc[:, lo:hi] = (alpha * acc_sc[:, lo:hi]
                            + jnp.dot(p.astype(jnp.bfloat16), v[:, lo:hi],
                                      preferred_element_type=jnp.float32))
        m_sc[:, lo:hi] = jnp.broadcast_to(m_new, (TQ, dk))
        l_sc[:, lo:hi] = jnp.broadcast_to(l_new, (TQ, dk))

    @pl.when(ki == nk - 1)
    def _():
        # Exact normalization (runs once per q-tile, negligible cost).
        ctx = (acc_sc[...] / l_sc[...]).astype(jnp.bfloat16)           # (TQ, D)
        attn = jnp.dot(ctx, wo_ref[...],
                       preferred_element_type=jnp.float32) + bo_ref[...]
        x1_ref[0] = (x_ref[0].astype(jnp.float32) + attn).astype(x1_ref.dtype)


# ---------------------------------------------------------------------------
# Kernel C: LN2 + position-wise FFN (F axis as reduction grid axis) + residual
# ---------------------------------------------------------------------------
def ffn_kernel(x1_ref, g2_ref, be2_ref, w1_ref, b1_ref, w2_ref, b2_ref, o_ref,
               xn_sc, acc_sc, *, eps):
    fi = pl.program_id(2)
    nf = pl.num_programs(2)

    @pl.when(fi == 0)
    def _():
        x1 = x1_ref[0].astype(jnp.float32)
        xn_sc[...] = _layer_norm(x1, g2_ref[...], be2_ref[...], eps).astype(jnp.bfloat16)
        acc_sc[...] = jnp.zeros(acc_sc.shape, jnp.float32)

    hid = jnp.dot(xn_sc[...], w1_ref[...],
                  preferred_element_type=jnp.float32) + b1_ref[...]
    hid = jnp.maximum(hid, 0.0).astype(jnp.bfloat16)                   # ReLU
    acc_sc[...] += jnp.dot(hid, w2_ref[...], preferred_element_type=jnp.float32)

    @pl.when(fi == nf - 1)
    def _():
        o_ref[0] = (x1_ref[0].astype(jnp.float32)
                    + acc_sc[...] + b2_ref[...]).astype(o_ref.dtype)


# ---------------------------------------------------------------------------
# Wrapper
# ---------------------------------------------------------------------------
def _pick_tile(total, pref, align=8):
    """Largest divisor of `total` that is <= pref and (align-multiple or == total)."""
    t = min(pref, total)
    for cand in range(t, 0, -1):
        if total % cand == 0 and (cand % align == 0 or cand == total):
            return cand
    return total


def _vmem_limit_and_cap():
    try:
        cap = int(pltpu.get_tpu_info().vmem_capacity_bytes)
    except Exception:
        cap = 64 * 1024 * 1024          # conservative (v7x-sized) fallback
    limit = min(cap - 16 * 1024 * 1024, 100 * 1024 * 1024)
    return max(limit, 32 * 1024 * 1024), cap


def encoder_layer(x, params, *, num_heads, eps=1e-6,
                  tq=None, tkv=None, tp=None, tf=None):
    B, S, D = x.shape
    F = params['w1'].shape[1]
    assert D % num_heads == 0
    bf16, f32 = jnp.bfloat16, jnp.float32

    vmem_limit, vmem_cap = _vmem_limit_and_cap()
    big_vmem = vmem_cap > 96 * 1024 * 1024          # v5e/v6e (128 MiB) vs v7x (64 MiB)

    if tq is None:
        tq = 512 if big_vmem else 256
    if tkv is None:
        tkv = 1024 if big_vmem else 512
    if tp is None:
        tp = 512
    tq = _pick_tile(S, tq)
    tkv = _pick_tile(S, tkv)
    tp = _pick_tile(S, tp)
    # Keep >= 2 parallel grid steps so both v7x TensorCores get work.
    if B * (S // tq) < 2 and tq > 8:
        tq = _pick_tile(S, max(8, tq // 2))

    # FFN weights: VMEM-resident when small, grid-streamed in tf chunks otherwise.
    ffn_weight_bytes = 2 * D * F * 2 * 2            # w1 + w2, bf16, double-buffered
    if tf is None:
        tf = F if ffn_weight_bytes <= vmem_limit // 3 else 2048
    tf = _pick_tile(F, tf, align=128)

    # MXU-feeding weights in bf16; biases / LN affine stay f32 (all elementwise f32).
    wq, bq = params['wq'].astype(bf16), params['bq'].astype(f32)
    wk, bk = params['wk'].astype(bf16), params['bk'].astype(f32)
    wv, bv = params['wv'].astype(bf16), params['bv'].astype(f32)
    wo, bo = params['wo'].astype(bf16), params['bo'].astype(f32)
    g1, be1 = params['g1'].astype(f32), params['be1'].astype(f32)
    g2, be2 = params['g2'].astype(f32), params['be2'].astype(f32)
    w1, bf1 = params['w1'].astype(bf16), params['bf1'].astype(f32)
    w2, bf2 = params['w2'].astype(bf16), params['bf2'].astype(f32)

    def const_spec(arr):
        zeros = (0,) * arr.ndim
        return pl.BlockSpec(arr.shape, lambda *_: zeros)

    cparams2 = pltpu.CompilerParams(
        dimension_semantics=("parallel", "parallel"),
        vmem_limit_bytes=vmem_limit)
    cparams3 = pltpu.CompilerParams(
        dimension_semantics=("parallel", "parallel", "arbitrary"),
        vmem_limit_bytes=vmem_limit)

    # ---- Kernel A: LN1 + Q/K/V projection (once per token) -------------------
    q, k, v = pl.pallas_call(
        functools.partial(qkv_proj_kernel, num_heads=num_heads, eps=eps),
        grid=(B, S // tp),
        in_specs=[pl.BlockSpec((1, tp, D), lambda b, i: (b, i, 0))]
                 + [const_spec(w) for w in (wq, bq, wk, bk, wv, bv, g1, be1)],
        out_specs=[pl.BlockSpec((1, tp, D), lambda b, i: (b, i, 0)) for _ in range(3)],
        out_shape=[jax.ShapeDtypeStruct((B, S, D), bf16) for _ in range(3)],
        compiler_params=cparams2,
        cost_estimate=pl.CostEstimate(
            flops=2 * B * S * D * D * 3,
            transcendentals=0,
            bytes_accessed=B * S * D * (4 + 3 * 2) + 3 * D * D * 2),
    )(x, wq, bq, wk, bk, wv, bv, g1, be1)

    # ---- Kernel B: flash attention + Wo + residual ---------------------------
    x1 = pl.pallas_call(
        functools.partial(attn_kernel, num_heads=num_heads),
        grid=(B, S // tq, S // tkv),
        in_specs=[pl.BlockSpec((1, tq, D), lambda b, qi, ki: (b, qi, 0)),    # x (residual)
                  pl.BlockSpec((1, tq, D), lambda b, qi, ki: (b, qi, 0)),    # q
                  pl.BlockSpec((1, tkv, D), lambda b, qi, ki: (b, ki, 0)),   # k
                  pl.BlockSpec((1, tkv, D), lambda b, qi, ki: (b, ki, 0)),   # v
                  const_spec(wo), const_spec(bo)],
        out_specs=pl.BlockSpec((1, tq, D), lambda b, qi, ki: (b, qi, 0)),
        out_shape=jax.ShapeDtypeStruct((B, S, D), f32),
        scratch_shapes=[pltpu.VMEM((tq, D), f32),        # running max  (slab)
                        pltpu.VMEM((tq, D), f32),        # running sum  (slab)
                        pltpu.VMEM((tq, D), f32)],       # ctx accumulator
        compiler_params=cparams3,
        cost_estimate=pl.CostEstimate(
            flops=4 * B * S * S * D + 2 * B * S * D * D,
            transcendentals=B * num_heads * S * S,
            bytes_accessed=(B * S * D * 4                      # x
                            + B * S * D * 2                    # q
                            + 2 * B * S * D * 2 * (S // tq)    # k,v re-streamed per q tile
                            + B * S * D * 4                    # x1 out
                            + D * D * 2)),
    )(x, q, k, v, wo, bo)

    # ---- Kernel C: LN2 + FFN (F-axis reduction grid) + residual --------------
    out = pl.pallas_call(
        functools.partial(ffn_kernel, eps=eps),
        grid=(B, S // tq, F // tf),
        in_specs=[pl.BlockSpec((1, tq, D), lambda b, i, fi: (b, i, 0)),      # x1
                  const_spec(g2), const_spec(be2),
                  pl.BlockSpec((D, tf), lambda b, i, fi: (0, fi)),           # w1 chunk
                  pl.BlockSpec((1, tf), lambda b, i, fi: (0, fi)),           # b1 chunk
                  pl.BlockSpec((tf, D), lambda b, i, fi: (fi, 0)),           # w2 chunk
                  const_spec(bf2)],
        out_specs=pl.BlockSpec((1, tq, D), lambda b, i, fi: (b, i, 0)),
        out_shape=jax.ShapeDtypeStruct((B, S, D), x.dtype),
        scratch_shapes=[pltpu.VMEM((tq, D), bf16),       # LN2(x1), cached across F chunks
                        pltpu.VMEM((tq, D), f32)],       # FFN accumulator
        compiler_params=cparams3,
        cost_estimate=pl.CostEstimate(
            flops=4 * B * S * D * F,
            transcendentals=0,
            bytes_accessed=(3 * B * S * D * 4
                            + (B * (S // tq) if tf < F else 1) * 2 * D * F * 2)),
    )(x1, g2, be2, w1, bf1, w2, bf2)

    return out


# ---------------------------------------------------------------------------
# pure-JAX reference (Annotated-Transformer semantics, f32) for correctness
# ---------------------------------------------------------------------------
def reference(x, p, *, num_heads, eps=1e-6):
    B, S, D = x.shape
    dk = D // num_heads

    def ln(v, g, b):
        mu = jnp.mean(v, axis=-1, keepdims=True)
        std = jnp.sqrt(jnp.sum((v - mu) ** 2, axis=-1, keepdims=True) / (D - 1))
        return g * (v - mu) / (std + eps) + b

    xn = ln(x, p['g1'], p['be1'])
    q = xn @ p['wq'] + p['bq']
    k = xn @ p['wk'] + p['bk']
    v = xn @ p['wv'] + p['bv']
    qh = q.reshape(B, S, num_heads, dk).transpose(0, 2, 1, 3)
    kh = k.reshape(B, S, num_heads, dk).transpose(0, 2, 1, 3)
    vh = v.reshape(B, S, num_heads, dk).transpose(0, 2, 1, 3)
    scores = jnp.einsum('bhqd,bhkd->bhqk', qh, kh) / np.sqrt(dk)
    pr = jax.nn.softmax(scores, axis=-1)
    ctx = jnp.einsum('bhqk,bhkd->bhqd', pr, vh).transpose(0, 2, 1, 3).reshape(B, S, D)
    x1 = x + (ctx @ p['wo'] + p['bo'])
    xn2 = ln(x1, p['g2'], p['be2'])
    ff = jnp.maximum(xn2 @ p['w1'] + p['bf1'], 0.0) @ p['w2'] + p['bf2']
    return x1 + ff


if __name__ == "__main__":
    B, S, D, H, F = 2, 8, 32, 4, 64

    key = jax.random.PRNGKey(0)
    keys = jax.random.split(key, 20)

    def init(k, shape, scale=0.1):
        return (scale * jax.random.normal(k, shape)).astype(jnp.float32)

    params = {
        'wq': init(keys[0], (D, D)), 'bq': init(keys[6], (1, D), 0.05),
        'wk': init(keys[1], (D, D)), 'bk': init(keys[7], (1, D), 0.05),
        'wv': init(keys[2], (D, D)), 'bv': init(keys[8], (1, D), 0.05),
        'wo': init(keys[3], (D, D)), 'bo': init(keys[9], (1, D), 0.05),
        'g1': 1.0 + init(keys[10], (1, D), 0.05), 'be1': init(keys[11], (1, D), 0.05),
        'g2': 1.0 + init(keys[12], (1, D), 0.05), 'be2': init(keys[13], (1, D), 0.05),
        'w1': init(keys[4], (D, F)), 'bf1': init(keys[14], (1, F), 0.05),
        'w2': init(keys[5], (F, D)), 'bf2': init(keys[15], (1, D), 0.05),
    }

    x = jax.random.normal(keys[16], (B, S, D), dtype=jnp.float32)

    # TODO(synk): attention mask path (mask=None default is what is implemented).
    out = encoder_layer(x, params, num_heads=H)
    out = jax.block_until_ready(out)

    ref = reference(x, params, num_heads=H)
    np.testing.assert_allclose(np.asarray(out), np.asarray(ref), rtol=2e-2, atol=2e-2)

    print("KERNEL_OK")
</pallas_src>

<mosaic_0001>
module attributes {stable_mosaic.version = 11 : i64} {
  func.func @qkv_proj_kernel(%arg0: i32, %arg1: i32, %arg2: memref<1x8x32xf32, #tpu.memory_space<vmem>>, %arg3: memref<32x32xbf16, #tpu.memory_space<vmem>>, %arg4: memref<1x32xf32, #tpu.memory_space<vmem>>, %arg5: memref<32x32xbf16, #tpu.memory_space<vmem>>, %arg6: memref<1x32xf32, #tpu.memory_space<vmem>>, %arg7: memref<32x32xbf16, #tpu.memory_space<vmem>>, %arg8: memref<1x32xf32, #tpu.memory_space<vmem>>, %arg9: memref<1x32xf32, #tpu.memory_space<vmem>>, %arg10: memref<1x32xf32, #tpu.memory_space<vmem>>, %arg11: memref<1x8x32xbf16, #tpu.memory_space<vmem>>, %arg12: memref<1x8x32xbf16, #tpu.memory_space<vmem>>, %arg13: memref<1x8x32xbf16, #tpu.memory_space<vmem>>) attributes {dimension_semantics = [#tpu.dimension_semantics<parallel>, #tpu.dimension_semantics<parallel>], iteration_bounds = array<i64: 2, 1>, scalar_prefetch = 0 : i64, scratch_operands = 0 : i64, tpu.core_type = #tpu.core_type<tc>, window_params = [{transform_indices = @transform_0, window_bounds = array<i64: 1, 8, 32>}, {pipeline_mode = #tpu.pipeline_mode<synchronous>, transform_indices = @transform_1, window_bounds = array<i64: 32, 32>}, {pipeline_mode = #tpu.pipeline_mode<synchronous>, transform_indices = @transform_2, window_bounds = array<i64: 1, 32>}, {pipeline_mode = #tpu.pipeline_mode<synchronous>, transform_indices = @transform_3, window_bounds = array<i64: 32, 32>}, {pipeline_mode = #tpu.pipeline_mode<synchronous>, transform_indices = @transform_4, window_bounds = array<i64: 1, 32>}, {pipeline_mode = #tpu.pipeline_mode<synchronous>, transform_indices = @transform_5, window_bounds = array<i64: 32, 32>}, {pipeline_mode = #tpu.pipeline_mode<synchronous>, transform_indices = @transform_6, window_bounds = array<i64: 1, 32>}, {pipeline_mode = #tpu.pipeline_mode<synchronous>, transform_indices = @transform_7, window_bounds = array<i64: 1, 32>}, {pipeline_mode = #tpu.pipeline_mode<synchronous>, transform_indices = @transform_8, window_bounds = array<i64: 1, 32>}, {transform_indices = @transform_9, window_bounds = array<i64: 1, 8, 32>}, {transform_indices = @transform_10, window_bounds = array<i64: 1, 8, 32>}, {transform_indices = @transform_11, window_bounds = array<i64: 1, 8, 32>}]} {
    %c0 = arith.constant 0 : index
    %c0_0 = arith.constant 0 : index
    %c0_1 = arith.constant 0 : index
    %0 = vector.load %arg2[%c0, %c0_0, %c0_1] : memref<1x8x32xf32, #tpu.memory_space<vmem>>, vector<1x8x32xf32>
    %1 = vector.shape_cast %0 : vector<1x8x32xf32> to vector<8x32xf32>
    %c0_2 = arith.constant 0 : index
    %c0_3 = arith.constant 0 : index
    %2 = vector.load %arg9[%c0_2, %c0_3] : memref<1x32xf32, #tpu.memory_space<vmem>>, vector<1x32xf32>
    %c0_4 = arith.constant 0 : index
    %c0_5 = arith.constant 0 : index
    %3 = vector.load %arg10[%c0_4, %c0_5] : memref<1x32xf32, #tpu.memory_space<vmem>>, vector<1x32xf32>
    %cst = arith.constant dense<0.000000e+00> : vector<8xf32>
    %4 = vector.multi_reduction <add>, %1, %cst [1] : vector<8x32xf32> to vector<8xf32>
    %5 = vector.shape_cast %4 : vector<8xf32> to vector<8x1xf32>
    %cst_6 = arith.constant 3.200000e+01 : f32
    %6 = vector.broadcast %cst_6 : f32 to vector<8x1xf32>
    %7 = arith.divf %5, %6 : vector<8x1xf32>
    %8 = vector.broadcast %7 : vector<8x1xf32> to vector<8x32xf32>
    %9 = arith.subf %1, %8 : vector<8x32xf32>
    %10 = arith.mulf %9, %9 : vector<8x32xf32>
    %cst_7 = arith.constant dense<0.000000e+00> : vector<8xf32>
    %11 = vector.multi_reduction <add>, %10, %cst_7 [1] : vector<8x32xf32> to vector<8xf32>
    %12 = vector.shape_cast %11 : vector<8xf32> to vector<8x1xf32>
    %cst_8 = arith.constant 0.0322580636 : f32
    %13 = vector.broadcast %cst_8 : f32 to vector<8x1xf32>
    %14 = arith.mulf %12, %13 : vector<8x1xf32>
    %15 = vector.broadcast %7 : vector<8x1xf32> to vector<8x32xf32>
    %16 = arith.subf %1, %15 : vector<8x32xf32>
    %17 = math.sqrt %14 : vector<8x1xf32>
    %cst_9 = arith.constant 9.99999997E-7 : f32
    %18 = vector.broadcast %cst_9 : f32 to vector<8x1xf32>
    %19 = arith.addf %17, %18 : vector<8x1xf32>
    %20 = vector.broadcast %19 : vector<8x1xf32> to vector<8x32xf32>
    %21 = arith.divf %16, %20 : vector<8x32xf32>
    %22 = vector.broadcast %2 : vector<1x32xf32> to vector<8x32xf32>
    %23 = arith.mulf %21, %22 : vector<8x32xf32>
    %24 = vector.broadcast %3 : vector<1x32xf32> to vector<8x32xf32>
    %25 = arith.addf %23, %24 : vector<8x32xf32>
    %26 = arith.truncf %25 : vector<8x32xf32> to vector<8x32xbf16>
    %c0_10 = arith.constant 0 : index
    %c0_11 = arith.constant 0 : index
    %27 = vector.load %arg3[%c0_10, %c0_11] : memref<32x32xbf16, #tpu.memory_space<vmem>>, vector<32x32xbf16>
    %cst_12 = arith.constant dense<0.000000e+00> : vector<8x32xf32>
    %28 = tpu.matmul %26, %27, %cst_12 {dimension_numbers = #tpu.dot_dimension_numbers<[1], [0], [0], [1], [0, 0, 1, 1], [], []>} : vector<8x32xbf16>, vector<32x32xbf16>, vector<8x32xf32> -> vector<8x32xf32>
    %c0_13 = arith.constant 0 : index
    %c0_14 = arith.constant 0 : index
    %29 = vector.load %arg4[%c0_13, %c0_14] : memref<1x32xf32, #tpu.memory_space<vmem>>, vector<1x32xf32>
    %30 = vector.broadcast %29 : vector<1x32xf32> to vector<8x32xf32>
    %31 = arith.addf %28, %30 : vector<8x32xf32>
    %cst_15 = arith.constant 0.353553385 : f32
    %32 = vector.broadcast %cst_15 : f32 to vector<8x32xf32>
    %33 = arith.mulf %31, %32 : vector<8x32xf32>
    %34 = arith.truncf %33 : vector<8x32xf32> to vector<8x32xbf16>
    %c0_16 = arith.constant 0 : index
    %c0_17 = arith.constant 0 : index
    %c0_18 = arith.constant 0 : index
    %35 = vector.load %arg11[%c0_16, %c0_17, %c0_18] : memref<1x8x32xbf16, #tpu.memory_space<vmem>>, vector<1x8x32xbf16>
    %36 = vector.shape_cast %35 : vector<1x8x32xbf16> to vector<8x32xbf16>
    %37 = vector.shape_cast %34 : vector<8x32xbf16> to vector<1x8x32xbf16>
    tpu.vector_store %arg11[%c0_16, %c0_17, %c0_18], %37 {strides = array<i32>} : memref<1x8x32xbf16, #tpu.memory_space<vmem>>, vector<1x8x32xbf16>,
    %c0_19 = arith.constant 0 : index
    %c0_20 = arith.constant 0 : index
    %38 = vector.load %arg5[%c0_19, %c0_20] : memref<32x32xbf16, #tpu.memory_space<vmem>>, vector<32x32xbf16>
    %cst_21 = arith.constant dense<0.000000e+00> : vector<8x32xf32>
    %39 = tpu.matmul %26, %38, %cst_21 {dimension_numbers = #tpu.dot_dimension_numbers<[1], [0], [0], [1], [0, 0, 1, 1], [], []>} : vector<8x32xbf16>, vector<32x32xbf16>, vector<8x32xf32> -> vector<8x32xf32>
    %c0_22 = arith.constant 0 : index
    %c0_23 = arith.constant 0 : index
    %40 = vector.load %arg6[%c0_22, %c0_23] : memref<1x32xf32, #tpu.memory_space<vmem>>, vector<1x32xf32>
    %41 = vector.broadcast %40 : vector<1x32xf32> to vector<8x32xf32>
    %42 = arith.addf %39, %41 : vector<8x32xf32>
    %43 = arith.truncf %42 : vector<8x32xf32> to vector<8x32xbf16>
    %c0_24 = arith.constant 0 : index
    %c0_25 = arith.constant 0 : index
    %c0_26 = arith.constant 0 : index
    %44 = vector.load %arg12[%c0_24, %c0_25, %c0_26] : memref<1x8x32xbf16, #tpu.memory_space<vmem>>, vector<1x8x32xbf16>
    %45 = vector.shape_cast %44 : vector<1x8x32xbf16> to vector<8x32xbf16>
    %46 = vector.shape_cast %43 : vector<8x32xbf16> to vector<1x8x32xbf16>
    tpu.vector_store %arg12[%c0_24, %c0_25, %c0_26], %46 {strides = array<i32>} : memref<1x8x32xbf16, #tpu.memory_space<vmem>>, vector<1x8x32xbf16>,
    %c0_27 = arith.constant 0 : index
    %c0_28 = arith.constant 0 : index
    %47 = vector.load %arg7[%c0_27, %c0_28] : memref<32x32xbf16, #tpu.memory_space<vmem>>, vector<32x32xbf16>
    %cst_29 = arith.constant dense<0.000000e+00> : vector<8x32xf32>
    %48 = tpu.matmul %26, %47, %cst_29 {dimension_numbers = #tpu.dot_dimension_numbers<[1], [0], [0], [1], [0, 0, 1, 1], [], []>} : vector<8x32xbf16>, vector<32x32xbf16>, vector<8x32xf32> -> vector<8x32xf32>
    %c0_30 = arith.constant 0 : index
    %c0_31 = arith.constant 0 : index
    %49 = vector.load %arg8[%c0_30, %c0_31] : memref<1x32xf32, #tpu.memory_space<vmem>>, vector<1x32xf32>
    %50 = vector.broadcast %49 : vector<1x32xf32> to vector<8x32xf32>
    %51 = arith.addf %48, %50 : vector<8x32xf32>
    %52 = arith.truncf %51 : vector<8x32xf32> to vector<8x32xbf16>
    %c0_32 = arith.constant 0 : index
    %c0_33 = arith.constant 0 : index
    %c0_34 = arith.constant 0 : index
    %53 = vector.load %arg13[%c0_32, %c0_33, %c0_34] : memref<1x8x32xbf16, #tpu.memory_space<vmem>>, vector<1x8x32xbf16>
    %54 = vector.shape_cast %53 : vector<1x8x32xbf16> to vector<8x32xbf16>
    %55 = vector.shape_cast %52 : vector<8x32xbf16> to vector<1x8x32xbf16>
    tpu.vector_store %arg13[%c0_32, %c0_33, %c0_34], %55 {strides = array<i32>} : memref<1x8x32xbf16, #tpu.memory_space<vmem>>, vector<1x8x32xbf16>,
    return
  }
  func.func @transform_0(%arg0: i32, %arg1: i32) -> (i32, i32, i32) {
    %c0_i32 = arith.constant 0 : i32
    %c0_i32_0 = arith.constant 0 : i32
    return %arg0, %arg1, %c0_i32 : i32, i32, i32
  }
  func.func @transform_1(%arg0: i32, %arg1: i32) -> (i32, i32) {
    %c0_i32 = arith.constant 0 : i32
    %c0_i32_0 = arith.constant 0 : i32
    %c0_i32_1 = arith.constant 0 : i32
    return %c0_i32, %c0_i32_0 : i32, i32
  }
  func.func @transform_2(%arg0: i32, %arg1: i32) -> (i32, i32) {
    %c0_i32 = arith.constant 0 : i32
    %c0_i32_0 = arith.constant 0 : i32
    %c0_i32_1 = arith.constant 0 : i32
    return %c0_i32, %c0_i32_0 : i32, i32
  }
  func.func @transform_3(%arg0: i32, %arg1: i32) -> (i32, i32) {
    %c0_i32 = arith.constant 0 : i32
    %c0_i32_0 = arith.constant 0 : i32
    %c0_i32_1 = arith.constant 0 : i32
    return %c0_i32, %c0_i32_0 : i32, i32
  }
  func.func @transform_4(%arg0: i32, %arg1: i32) -> (i32, i32) {
    %c0_i32 = arith.constant 0 : i32
    %c0_i32_0 = arith.constant 0 : i32
    %c0_i32_1 = arith.constant 0 : i32
    return %c0_i32, %c0_i32_0 : i32, i32
  }
  func.func @transform_5(%arg0: i32, %arg1: i32) -> (i32, i32) {
    %c0_i32 = arith.constant 0 : i32
    %c0_i32_0 = arith.constant 0 : i32
    %c0_i32_1 = arith.constant 0 : i32
    return %c0_i32, %c0_i32_0 : i32, i32
  }
  func.func @transform_6(%arg0: i32, %arg1: i32) -> (i32, i32) {
    %c0_i32 = arith.constant 0 : i32
    %c0_i32_0 = arith.constant 0 : i32
    %c0_i32_1 = arith.constant 0 : i32
    return %c0_i32, %c0_i32_0 : i32, i32
  }
  func.func @transform_7(%arg0: i32, %arg1: i32) -> (i32, i32) {
    %c0_i32 = arith.constant 0 : i32
    %c0_i32_0 = arith.constant 0 : i32
    %c0_i32_1 = arith.constant 0 : i32
    return %c0_i32, %c0_i32_0 : i32, i32
  }
  func.func @transform_8(%arg0: i32, %arg1: i32) -> (i32, i32) {
    %c0_i32 = arith.constant 0 : i32
    %c0_i32_0 = arith.constant 0 : i32
    %c0_i32_1 = arith.constant 0 : i32
    return %c0_i32, %c0_i32_0 : i32, i32
  }
  func.func @transform_9(%arg0: i32, %arg1: i32) -> (i32, i32, i32) {
    %c0_i32 = arith.constant 0 : i32
    %c0_i32_0 = arith.constant 0 : i32
    return %arg0, %arg1, %c0_i32 : i32, i32, i32
  }
  func.func @transform_10(%arg0: i32, %arg1: i32) -> (i32, i32, i32) {
    %c0_i32 = arith.constant 0 : i32
    %c0_i32_0 = arith.constant 0 : i32
    return %arg0, %arg1, %c0_i32 : i32, i32, i32
  }
  func.func @transform_11(%arg0: i32, %arg1: i32) -> (i32, i32, i32) {
    %c0_i32 = arith.constant 0 : i32
    %c0_i32_0 = arith.constant 0 : i32
    return %arg0, %arg1, %c0_i32 : i32, i32, i32
  }
}

</mosaic_0001>

<llo_original>
// kernel: tpu_custom_call.1
$region0: #{tpu_custom_call.1}
  #allocation0 [shape = 'u32[]', space=smem, size = 0x4, offset = 0x4, fixed_abs, tag = 'smem constant byte address 0x4 - core index']
  #allocation1 [shape = 'u32[72,128]{1,0:T(1,128)}', space=vmem, size = 0x9000, scoped, tag = 'internal scratch']
  %s0 = inlined_call_operand.hbm [shape: f32[2,8,32], index: 0, kind: input, shape index: {}]
  %s1 = inlined_call_operand.hbm [shape: bf16[32,32], index: 1, kind: input, shape index: {}]
  %s2 = inlined_call_operand.vmem [shape: f32[1,32], index: 2, kind: input, shape index: {}]
  %s3 = inlined_call_operand.hbm [shape: bf16[32,32], index: 3, kind: input, shape index: {}]
  %s4 = inlined_call_operand.vmem [shape: f32[1,32], index: 4, kind: input, shape index: {}]
  %s5 = inlined_call_operand.hbm [shape: bf16[32,32], index: 5, kind: input, shape index: {}]
  %s6 = inlined_call_operand.vmem [shape: f32[1,32], index: 6, kind: input, shape index: {}]
  %s7 = inlined_call_operand.vmem [shape: f32[1,32], index: 7, kind: input, shape index: {}]
  %s8 = inlined_call_operand.vmem [shape: f32[1,32], index: 8, kind: input, shape index: {}]
  %s9 = inlined_call_operand.hbm [shape: bf16[2,8,32], index: 9, kind: output, shape index: {0}]
  %s10 = inlined_call_operand.hbm [shape: bf16[2,8,32], index: 10, kind: output, shape index: {1}]
  %s11 = inlined_call_operand.hbm [shape: bf16[2,8,32], index: 11, kind: output, shape index: {2}]
  %12 = xla_tuple %s9, %s10, %s11
  %s13 = sld [smem:[#allocation0]]
  $region101: #{tpu_custom_call.1} parent=0
    _
  %s15 = ssub.s32 1, %s13
  %s16 = scalar_select 0, %s15, %s13
  $region1: #{tpu_custom_call.1} parent=0
    #allocation2 [shape = 'u8[8192]{0}', space=vmem, size = 0x2000, scoped, tag = 'input window, operand 0']
    #allocation3 [shape = 's32[2]{0}', space=sflag, size = 0x8, scoped, tag = 'scoped memory for tpu_custom_call.1']
    #allocation4 [shape = 's32[2]{0}', space=sflag, size = 0x8, scoped, tag = 'scoped memory for tpu_custom_call.1']
    #allocation5 [shape = 'u8[8192]{0}', space=vmem, size = 0x2000, scoped, tag = 'input window, operand 1, single buffered']
    #allocation6 [shape = 's32[1]{0}', space=sflag, size = 0x4, scoped, tag = 'scoped memory for tpu_custom_call.1']
    #allocation7 [shape = 'u8[8192]{0}', space=vmem, size = 0x2000, scoped, tag = 'input window, operand 3, single buffered']
    #allocation8 [shape = 'u8[8192]{0}', space=vmem, size = 0x2000, scoped, tag = 'input window, operand 5, single buffered']
    #allocation9 [shape = 's32[1]{0}', space=sflag, size = 0x4, scoped, tag = 'scoped memory for tpu_custom_call.1']
    #allocation10 [shape = 'u8[4096]{0}', space=vmem, size = 0x1000, scoped, tag = 'output window, operand 0']
    #allocation11 [shape = 'u8[4096]{0}', space=vmem, size = 0x1000, scoped, tag = 'output window, operand 1']
    #allocation12 [shape = 's32[2]{0}', space=sflag, size = 0x8, scoped, tag = 'scoped memory for tpu_custom_call.1']
    #allocation13 [shape = 'u8[4096]{0}', space=vmem, size = 0x1000, scoped, tag = 'output window, operand 2']
    %17 = vsyncpa [#allocation3], 0
    %s18 = scalar_lea.sflag [#allocation3], 1
    %19 = vsyncpa %s18, 0
    %20 = vsyncpa [#allocation6], 0
    %21 = vsyncpa [#allocation9], 0
    %22 = vsyncpa [#allocation4], 0
    %s23 = scalar_lea.sflag [#allocation4], 1
    %24 = vsyncpa %s23, 0
    %25 = vsyncpa [#allocation12], 0
    %s26 = scalar_lea.sflag [#allocation12], 1
    %27 = vsyncpa %s26, 0
    loop: start=0, step=1, limit=4
    $region2: #{tpu_custom_call.1} parent=1 // loop_pre_header
      _
    $region3: #{tpu_custom_call.1} parent=1 // loop_header
      %s29 = sphi 0, %s33
      %p30 = scmp.ge.s32.totalorder %s29, 4
      %s36 = sphi 0, %s48
      %s37 = sphi 0, %s44
      %s38 = sphi 0, %s36
      %s39 = sphi 0, %s37
      %s40 = sphi 0, %s38
      %s41 = sphi 0, %s39
      %s53 = sphi 0, %s55
      %s56 = sphi 0, %s53
      %s57 = sphi 0, %s56
      %s73 = sphi 0, %s57
      %s77 = sphi 0, %s77
      %s79 = sphi 0, %s77
      %s80 = sphi 0, %s79
      %s94 = sphi 0, %s80
      %s98 = sphi 0, %s98
      %s100 = sphi 0, %s98
      %s101 = sphi 0, %s100
      %s115 = sphi 0, %s101
      %s119 = sphi 0, %s119
      %s121 = sphi 0, %s119
      %s122 = sphi 0, %s121
      %s136 = sphi 0, %s122
      %s140 = sphi 0, %s140
      %s142 = sphi 0, %s140
      %s143 = sphi 0, %s142
      %s157 = sphi 0, %s143
      %s161 = sphi 0, %s161
      %s163 = sphi 0, %s161
      %s164 = sphi 0, %s163
      %s178 = sphi 0, %s164
      %s182 = sphi 0, %s182
      %s184 = sphi 0, %s182
      %s185 = sphi 0, %s184
      %s199 = sphi 0, %s185
      %s203 = sphi 0, %s203
      %s205 = sphi 0, %s203
      %s206 = sphi 0, %s205
      %s220 = sphi 0, %s206
      %s224 = sphi 0, %s224
      %s226 = sphi 0, %s224
      %s227 = sphi 0, %s226
      %s241 = sphi 0, %s227
      %s249 = sphi 0, %s251
      %s252 = sphi 0, %s249
      %s253 = sphi 0, %s252
      %s269 = sphi 0, %s253
      %s277 = sphi 0, %s279
      %s280 = sphi 0, %s277
      %s281 = sphi 0, %s280
      %s297 = sphi 0, %s281
      %s305 = sphi 0, %s307
      %s308 = sphi 0, %s305
      %s309 = sphi 0, %s308
      %s325 = sphi 0, %s309
    $region4: #{tpu_custom_call.1} parent=1 // loop_header_branch
      %32 = sbr.rel (%p30) target = $region8
    $region5: #{tpu_custom_call.1} parent=1 // loop_body
      %s34 = ssub.s32 %s29, 1
      %s35 = ssub.s32 %s29, 2
      %s42 = sadd.s32 1, %s37
      %p43 = scmp.ge.s32.totalorder %s42, 1
      %s44 = scalar_select %p43, 0, %s42
      %s45 = sadd.s32 1, %s36
      %s46 = scalar_select %p43, %s45, %s36
      %p47 = scmp.ge.s32.totalorder %s46, 2
      %s48 = scalar_select %p47, 0, %s46
      %s49 = ssub.s32 %s36, %s48
      %s50 = ssub.s32 %s37, %s44
      %s51 = sor.u32 %s49, %s50
      %p52 = scmp.eq.s32.totalorder %s51, 0
      %s54 = sadd.s32 %s53, 1
      %s55 = scalar_select %p52, %s53, %s54
      %p58 = pneg %p52
      %p59 = scmp.eq.s32.totalorder %s29, 1
      %p60 = por %p58, %p59
      %p61 = scmp.ne.s32.totalorder %s53, %s56
      %p62 = scmp.eq.s32.totalorder %s29, 0
      %p63 = por %p61, %p62
      %p64 = scmp.ne.s32.totalorder %s53, %s56
      %p65 = scmp.eq.s32.totalorder %s34, 1
      %p66 = por %p64, %p65
      %p67 = scmp.ne.s32.totalorder %s56, %s57
      %p68 = scmp.eq.s32.totalorder %s34, 0
      %p69 = por %p67, %p68
      %p70 = scmp.ne.s32.totalorder %s56, %s57
      %p71 = scmp.eq.s32.totalorder %s35, 1
      %p72 = por %p70, %p71
      %p74 = scmp.ne.s32.totalorder %s57, %s73
      %p75 = scmp.eq.s32.totalorder %s35, 0
      %p76 = por %p74, %p75
      %s78 = sadd.s32 %s77, 1
      %p81 = scmp.eq.s32.totalorder %s29, 1
      %p82 = scmp.ne.s32.totalorder %s77, %s79
      %p83 = scmp.eq.s32.totalorder %s29, 0
      %p84 = por %p82, %p83
      %p85 = scmp.ne.s32.totalorder %s77, %s79
      %p86 = scmp.eq.s32.totalorder %s34, 1
      %p87 = por %p85, %p86
      %p88 = scmp.ne.s32.totalorder %s79, %s80
      %p89 = scmp.eq.s32.totalorder %s34, 0
      %p90 = por %p88, %p89
      %p91 = scmp.ne.s32.totalorder %s79, %s80
      %p92 = scmp.eq.s32.totalorder %s35, 1
      %p93 = por %p91, %p92
      %p95 = scmp.ne.s32.totalorder %s80, %s94
      %p96 = scmp.eq.s32.totalorder %s35, 0
      %p97 = por %p95, %p96
      %s99 = sadd.s32 %s98, 1
      %p102 = scmp.eq.s32.totalorder %s29, 1
      %p103 = scmp.ne.s32.totalorder %s98, %s100
      %p104 = scmp.eq.s32.totalorder %s29, 0
      %p105 = por %p103, %p104
      %p106 = scmp.ne.s32.totalorder %s98, %s100
      %p107 = scmp.eq.s32.totalorder %s34, 1
      %p108 = por %p106, %p107
      %p109 = scmp.ne.s32.totalorder %s100, %s101
      %p110 = scmp.eq.s32.totalorder %s34, 0
      %p111 = por %p109, %p110
      %p112 = scmp.ne.s32.totalorder %s100, %s101
      %p113 = scmp.eq.s32.totalorder %s35, 1
      %p114 = por %p112, %p113
      %p116 = scmp.ne.s32.totalorder %s101, %s115
      %p117 = scmp.eq.s32.totalorder %s35, 0
      %p118 = por %p116, %p117
      %s120 = sadd.s32 %s119, 1
      %p123 = scmp.eq.s32.totalorder %s29, 1
      %p124 = scmp.ne.s32.totalorder %s119, %s121
      %p125 = scmp.eq.s32.totalorder %s29, 0
      %p126 = por %p124, %p125
      %p127 = scmp.ne.s32.totalorder %s119, %s121
      %p128 = scmp.eq.s32.totalorder %s34, 1
      %p129 = por %p127, %p128
      %p130 = scmp.ne.s32.totalorder %s121, %s122
      %p131 = scmp.eq.s32.totalorder %s34, 0
      %p132 = por %p130, %p131
      %p133 = scmp.ne.s32.totalorder %s121, %s122
      %p134 = scmp.eq.s32.totalorder %s35, 1
      %p135 = por %p133, %p134
      %p137 = scmp.ne.s32.totalorder %s122, %s136
      %p138 = scmp.eq.s32.totalorder %s35, 0
      %p139 = por %p137, %p138
      %s141 = sadd.s32 %s140, 1
      %p144 = scmp.eq.s32.totalorder %s29, 1
      %p145 = scmp.ne.s32.totalorder %s140, %s142
      %p146 = scmp.eq.s32.totalorder %s29, 0
      %p147 = por %p145, %p146
      %p148 = scmp.ne.s32.totalorder %s140, %s142
      %p149 = scmp.eq.s32.totalorder %s34, 1
      %p150 = por %p148, %p149
      %p151 = scmp.ne.s32.totalorder %s142, %s143
      %p152 = scmp.eq.s32.totalorder %s34, 0
      %p153 = por %p151, %p152
      %p154 = scmp.ne.s32.totalorder %s142, %s143
      %p155 = scmp.eq.s32.totalorder %s35, 1
      %p156 = por %p154, %p155
      %p158 = scmp.ne.s32.totalorder %s143, %s157
      %p159 = scmp.eq.s32.totalorder %s35, 0
      %p160 = por %p158, %p159
      %s162 = sadd.s32 %s161, 1
      %p165 = scmp.eq.s32.totalorder %s29, 1
      %p166 = scmp.ne.s32.totalorder %s161, %s163
      %p167 = scmp.eq.s32.totalorder %s29, 0
      %p168 = por %p166, %p167
      %p169 = scmp.ne.s32.totalorder %s161, %s163
      %p170 = scmp.eq.s32.totalorder %s34, 1
      %p171 = por %p169, %p170
      %p172 = scmp.ne.s32.totalorder %s163, %s164
      %p173 = scmp.eq.s32.totalorder %s34, 0
      %p174 = por %p172, %p173
      %p175 = scmp.ne.s32.totalorder %s163, %s164
      %p176 = scmp.eq.s32.totalorder %s35, 1
      %p177 = por %p175, %p176
      %p179 = scmp.ne.s32.totalorder %s164, %s178
      %p180 = scmp.eq.s32.totalorder %s35, 0
      %p181 = por %p179, %p180
      %s183 = sadd.s32 %s182, 1
      %p186 = scmp.eq.s32.totalorder %s29, 1
      %p187 = scmp.ne.s32.totalorder %s182, %s184
      %p188 = scmp.eq.s32.totalorder %s29, 0
      %p189 = por %p187, %p188
      %p190 = scmp.ne.s32.totalorder %s182, %s184
      %p191 = scmp.eq.s32.totalorder %s34, 1
      %p192 = por %p190, %p191
      %p193 = scmp.ne.s32.totalorder %s184, %s185
      %p194 = scmp.eq.s32.totalorder %s34, 0
      %p195 = por %p193, %p194
      %p196 = scmp.ne.s32.totalorder %s184, %s185
      %p197 = scmp.eq.s32.totalorder %s35, 1
      %p198 = por %p196, %p197
      %p200 = scmp.ne.s32.totalorder %s185, %s199
      %p201 = scmp.eq.s32.totalorder %s35, 0
      %p202 = por %p200, %p201
      %s204 = sadd.s32 %s203, 1
      %p207 = scmp.eq.s32.totalorder %s29, 1
      %p208 = scmp.ne.s32.totalorder %s203, %s205
      %p209 = scmp.eq.s32.totalorder %s29, 0
      %p210 = por %p208, %p209
      %p211 = scmp.ne.s32.totalorder %s203, %s205
      %p212 = scmp.eq.s32.totalorder %s34, 1
      %p213 = por %p211, %p212
      %p214 = scmp.ne.s32.totalorder %s205, %s206
      %p215 = scmp.eq.s32.totalorder %s34, 0
      %p216 = por %p214, %p215
      %p217 = scmp.ne.s32.totalorder %s205, %s206
      %p218 = scmp.eq.s32.totalorder %s35, 1
      %p219 = por %p217, %p218
      %p221 = scmp.ne.s32.totalorder %s206, %s220
      %p222 = scmp.eq.s32.totalorder %s35, 0
      %p223 = por %p221, %p222
      %s225 = sadd.s32 %s224, 1
      %p228 = scmp.eq.s32.totalorder %s29, 1
      %p229 = scmp.ne.s32.totalorder %s224, %s226
      %p230 = scmp.eq.s32.totalorder %s29, 0
      %p231 = por %p229, %p230
      %p232 = scmp.ne.s32.totalorder %s224, %s226
      %p233 = scmp.eq.s32.totalorder %s34, 1
      %p234 = por %p232, %p233
      %p235 = scmp.ne.s32.totalorder %s226, %s227
      %p236 = scmp.eq.s32.totalorder %s34, 0
      %p237 = por %p235, %p236
      %p238 = scmp.ne.s32.totalorder %s226, %s227
      %p239 = scmp.eq.s32.totalorder %s35, 1
      %p240 = por %p238, %p239
      %p242 = scmp.ne.s32.totalorder %s227, %s241
      %p243 = scmp.eq.s32.totalorder %s35, 0
      %p244 = por %p242, %p243
      %s245 = ssub.s32 %s36, %s48
      %s246 = ssub.s32 %s37, %s44
      %s247 = sor.u32 %s245, %s246
      %p248 = scmp.eq.s32.totalorder %s247, 0
      %s250 = sadd.s32 %s249, 1
      %s251 = scalar_select %p248, %s249, %s250
      %p254 = pneg %p248
      %p255 = scmp.eq.s32.totalorder %s29, 1
      %p256 = por %p254, %p255
      %p257 = scmp.ne.s32.totalorder %s249, %s252
      %p258 = scmp.eq.s32.totalorder %s29, 0
      %p259 = por %p257, %p258
      %p260 = scmp.ne.s32.totalorder %s249, %s252
      %p261 = scmp.eq.s32.totalorder %s34, 1
      %p262 = por %p260, %p261
      %p263 = scmp.ne.s32.totalorder %s252, %s253
      %p264 = scmp.eq.s32.totalorder %s34, 0
      %p265 = por %p263, %p264
      %p266 = scmp.ne.s32.totalorder %s252, %s253
      %p267 = scmp.eq.s32.totalorder %s35, 1
      %p268 = por %p266, %p267
      %p270 = scmp.ne.s32.totalorder %s253, %s269
      %p271 = scmp.eq.s32.totalorder %s35, 0
      %p272 = por %p270, %p271
      %s273 = ssub.s32 %s36, %s48
      %s274 = ssub.s32 %s37, %s44
      %s275 = sor.u32 %s273, %s274
      %p276 = scmp.eq.s32.totalorder %s275, 0
      %s278 = sadd.s32 %s277, 1
      %s279 = scalar_select %p276, %s277, %s278
      %p282 = pneg %p276
      %p283 = scmp.eq.s32.totalorder %s29, 1
      %p284 = por %p282, %p283
      %p285 = scmp.ne.s32.totalorder %s277, %s280
      %p286 = scmp.eq.s32.totalorder %s29, 0
      %p287 = por %p285, %p286
      %p288 = scmp.ne.s32.totalorder %s277, %s280
      %p289 = scmp.eq.s32.totalorder %s34, 1
      %p290 = por %p288, %p289
      %p291 = scmp.ne.s32.totalorder %s280, %s281
      %p292 = scmp.eq.s32.totalorder %s34, 0
      %p293 = por %p291, %p292
      %p294 = scmp.ne.s32.totalorder %s280, %s281
      %p295 = scmp.eq.s32.totalorder %s35, 1
      %p296 = por %p294, %p295
      %p298 = scmp.ne.s32.totalorder %s281, %s297
      %p299 = scmp.eq.s32.totalorder %s35, 0
      %p300 = por %p298, %p299
      %s301 = ssub.s32 %s36, %s48
      %s302 = ssub.s32 %s37, %s44
      %s303 = sor.u32 %s301, %s302
      %p304 = scmp.eq.s32.totalorder %s303, 0
      %s306 = sadd.s32 %s305, 1
      %s307 = scalar_select %p304, %s305, %s306
      %p310 = pneg %p304
      %p311 = scmp.eq.s32.totalorder %s29, 1
      %p312 = por %p310, %p311
      %p313 = scmp.ne.s32.totalorder %s305, %s308
      %p314 = scmp.eq.s32.totalorder %s29, 0
      %p315 = por %p313, %p314
      %p316 = scmp.ne.s32.totalorder %s305, %s308
      %p317 = scmp.eq.s32.totalorder %s34, 1
      %p318 = por %p316, %p317
      %p319 = scmp.ne.s32.totalorder %s308, %s309
      %p320 = scmp.eq.s32.totalorder %s34, 0
      %p321 = por %p319, %p320
      %p322 = scmp.ne.s32.totalorder %s308, %s309
      %p323 = scmp.eq.s32.totalorder %s35, 1
      %p324 = por %p322, %p323
      %p326 = scmp.ne.s32.totalorder %s309, %s325
      %p327 = scmp.eq.s32.totalorder %s35, 0
      %p328 = por %p326, %p327
      %p329 = scmp.le.s32.totalorder 1, %s29
      %p330 = scmp.lt.s32.totalorder %s29, 3
      %p331 = pnand %p329, %p330
      %p332 = pneg %p331
      // Predicated region
      $region9: #{tpu_custom_call.1} parent=5 // pred_check
        _
      $region10: #{tpu_custom_call.1} parent=5 // pred_check_branch
        %334 = sbr.rel (%p331) target = $region12
      $region11: #{tpu_custom_call.1} parent=5 // pred_region
        %s335 = ssub.s32 %s29, 1
        // Predicated region
        $region13: #{tpu_custom_call.1} parent=11 // pred_check
          %p336 = pneg %p90
        $region14: #{tpu_custom_call.1} parent=11 // pred_check_branch
          %338 = sbr.rel (%p336) target = $region16
        $region15: #{tpu_custom_call.1} parent=11 // pred_region
          %340 = vsyncadd [#allocation6], 0
          %s341 = sshll.u32 %s1, 4
          %s342 = int_to_ptr.hbm [resolvable:$true] %s341
          %s343 = sshll.u32 [#allocation5], 4
          %s344 = int_to_ptr.vmem [resolvable:$true] %s343
          %349 = dma.hbm_to_vmem [thread:$0]  %s342, 256, %s344, [#allocation6], 64, 64, 4
        $region16: #{tpu_custom_call.1} parent=11 // pred_fallthru
          _
        // Predicated region
        $region17: #{tpu_custom_call.1} parent=11 // pred_check
          %p350 = pneg %p111
        $region18: #{tpu_custom_call.1} parent=11 // pred_check_branch
          %352 = sbr.rel (%p350) target = $region20
        $region19: #{tpu_custom_call.1} parent=11 // pred_region
          _
        $region20: #{tpu_custom_call.1} parent=11 // pred_fallthru
          _
        // Predicated region
        $region21: #{tpu_custom_call.1} parent=11 // pred_check
          %p353 = pneg %p132
        $region22: #{tpu_custom_call.1} parent=11 // pred_check_branch
          %355 = sbr.rel (%p353) target = $region24
        $region23: #{tpu_custom_call.1} parent=11 // pred_region
          %357 = vsyncadd [#allocation6], 0
          %s358 = sshll.u32 %s3, 4
          %s359 = int_to_ptr.hbm [resolvable:$true] %s358
          %s360 = sshll.u32 [#allocation7], 4
          %s361 = int_to_ptr.vmem [resolvable:$true] %s360
          %366 = dma.hbm_to_vmem [thread:$0]  %s359, 256, %s361, [#allocation6], 64, 64, 4
        $region24: #{tpu_custom_call.1} parent=11 // pred_fallthru
          _
        // Predicated region
        $region25: #{tpu_custom_call.1} parent=11 // pred_check
          %p367 = pneg %p153
        $region26: #{tpu_custom_call.1} parent=11 // pred_check_branch
          %369 = sbr.rel (%p367) target = $region28
        $region27: #{tpu_custom_call.1} parent=11 // pred_region
          _
        $region28: #{tpu_custom_call.1} parent=11 // pred_fallthru
          _
        // Predicated region
        $region29: #{tpu_custom_call.1} parent=11 // pred_check
          %p370 = pneg %p174
        $region30: #{tpu_custom_call.1} parent=11 // pred_check_branch
          %372 = sbr.rel (%p370) target = $region32
        $region31: #{tpu_custom_call.1} parent=11 // pred_region
          %374 = vsyncadd [#allocation9], 0
          %s375 = sshll.u32 %s5, 4
          %s376 = int_to_ptr.hbm [resolvable:$true] %s375
          %s377 = sshll.u32 [#allocation8], 4
          %s378 = int_to_ptr.vmem [resolvable:$true] %s377
          %383 = dma.hbm_to_vmem [thread:$0]  %s376, 256, %s378, [#allocation9], 64, 64, 4
        $region32: #{tpu_custom_call.1} parent=11 // pred_fallthru
          _
        // Predicated region
        $region33: #{tpu_custom_call.1} parent=11 // pred_check
          %p384 = pneg %p195
        $region34: #{tpu_custom_call.1} parent=11 // pred_check_branch
          %386 = sbr.rel (%p384) target = $region36
        $region35: #{tpu_custom_call.1} parent=11 // pred_region
          _
        $region36: #{tpu_custom_call.1} parent=11 // pred_fallthru
          _
        // Predicated region
        $region37: #{tpu_custom_call.1} parent=11 // pred_check
          %p387 = pneg %p216
        $region38: #{tpu_custom_call.1} parent=11 // pred_check_branch
          %389 = sbr.rel (%p387) target = $region40
        $region39: #{tpu_custom_call.1} parent=11 // pred_region
          _
        $region40: #{tpu_custom_call.1} parent=11 // pred_fallthru
          _
        // Predicated region
        $region41: #{tpu_custom_call.1} parent=11 // pred_check
          %p390 = pneg %p237
        $region42: #{tpu_custom_call.1} parent=11 // pred_check_branch
          %392 = sbr.rel (%p390) target = $region44
        $region43: #{tpu_custom_call.1} parent=11 // pred_region
          _
        $region44: #{tpu_custom_call.1} parent=11 // pred_fallthru
          _
      $region12: #{tpu_custom_call.1} parent=5 // pred_fallthru
        _
      %p393 = scmp.lt.s32.totalorder %s29, 2
      // Predicated region
      $region45: #{tpu_custom_call.1} parent=5 // pred_check
        %p394 = pneg %p393
      $region46: #{tpu_custom_call.1} parent=5 // pred_check_branch
        %396 = sbr.rel (%p394) target = $region48
      $region47: #{tpu_custom_call.1} parent=5 // pred_region
        // Predicated region
        $region49: #{tpu_custom_call.1} parent=47 // pred_check
          %p397 = pneg %p63
        $region50: #{tpu_custom_call.1} parent=47 // pred_check_branch
          %399 = sbr.rel (%p397) target = $region52
        $region51: #{tpu_custom_call.1} parent=47 // pred_region
          %s400 = sand.u32 %s53, 1
          %s401 = scalar_lea.sflag [#allocation3], %s400
          %s402 = sand.u32 %s53, 1
          %s403 = smul.addr %s402, 8
          %s404 = scalar_lea.vmem [#allocation2], %s403
          %406 = vsyncadd %s401, 0
          %s407 = sadd.s32 %s37, %s36
          %s408 = smul.addr %s407, 8
          %s409 = scalar_lea.hbm %s0, %s408
          %s411 = sshll.u32 %s409, 4
          %s412 = int_to_ptr.hbm [resolvable:$true] %s411
          %s413 = sshll.u32 %s404, 4
          %s414 = int_to_ptr.vmem [resolvable:$true] %s413
          %416 = dma.hbm_to_vmem [thread:$0]  %s412, 128, %s414, %s401
        $region52: #{tpu_custom_call.1} parent=47 // pred_fallthru
          _
      $region48: #{tpu_custom_call.1} parent=5 // pred_fallthru
        _
      %p417 = scmp.le.s32.totalorder 1, %s29
      %p418 = scmp.lt.s32.totalorder %s29, 3
      %p419 = pnand %p417, %p418
      %p420 = pneg %p419
      // Predicated region
      $region53: #{tpu_custom_call.1} parent=5 // pred_check
        _
      $region54: #{tpu_custom_call.1} parent=5 // pred_check_branch
        %422 = sbr.rel (%p419) target = $region56
      $region55: #{tpu_custom_call.1} parent=5 // pred_region
        %s423 = ssub.s32 %s29, 1
        %s424 = sand.u32 %s56, 1
        %s425 = scalar_lea.sflag [#allocation3], %s424
        %s426 = sand.u32 %s56, 1
        %s427 = smul.addr %s426, 8
        %s428 = scalar_lea.vmem [#allocation2], %s427
        // Predicated region
        $region57: #{tpu_custom_call.1} parent=55 // pred_check
          %p429 = pneg %p69
        $region58: #{tpu_custom_call.1} parent=55 // pred_check_branch
          %431 = sbr.rel (%p429) target = $region60
        $region59: #{tpu_custom_call.1} parent=55 // pred_region
          %433 = dma.done %s425, 128
        $region60: #{tpu_custom_call.1} parent=55 // pred_fallthru
          _
        // Predicated region
        $region61: #{tpu_custom_call.1} parent=55 // pred_check
          %p434 = pneg %p90
        $region62: #{tpu_custom_call.1} parent=55 // pred_check_branch
          %436 = sbr.rel (%p434) target = $region64
        $region63: #{tpu_custom_call.1} parent=55 // pred_region
          %438 = dma.done [#allocation6], 256
        $region64: #{tpu_custom_call.1} parent=55 // pred_fallthru
          _
        // Predicated region
        $region65: #{tpu_custom_call.1} parent=55 // pred_check
          %p439 = pneg %p132
        $region66: #{tpu_custom_call.1} parent=55 // pred_check_branch
          %441 = sbr.rel (%p439) target = $region68
        $region67: #{tpu_custom_call.1} parent=55 // pred_region
          %443 = dma.done [#allocation6], 256
        $region68: #{tpu_custom_call.1} parent=55 // pred_fallthru
          _
        // Predicated region
        $region69: #{tpu_custom_call.1} parent=55 // pred_check
          %p444 = pneg %p174
        $region70: #{tpu_custom_call.1} parent=55 // pred_check_branch
          %446 = sbr.rel (%p444) target = $region72
        $region71: #{tpu_custom_call.1} parent=55 // pred_region
          %448 = dma.done [#allocation9], 256
        $region72: #{tpu_custom_call.1} parent=55 // pred_fallthru
          _
        %s449 = sand.u32 %s56, 1
        %s450 = scalar_lea.sflag [#allocation3], %s449
        %s451 = sand.u32 %s56, 1
        %s452 = smul.addr %s451, 8
        %s453 = scalar_lea.vmem [#allocation2], %s452
        %p454 = pneg %p69
        %p455 = pneg %p66
        %p456 = pneg %p90
        %p457 = pneg %p87
        %p458 = pneg %p111
        %p459 = pneg %p108
        %p460 = pneg %p132
        %p461 = pneg %p129
        %p462 = pneg %p153
        %p463 = pneg %p150
        %p464 = pneg %p174
        %p465 = pneg %p171
        %p466 = pneg %p195
        %p467 = pneg %p192
        %p468 = pneg %p216
        %p469 = pneg %p213
        %p470 = pneg %p237
        %p471 = pneg %p234
        %p472 = pneg %p265
        %p473 = pneg %p262
        %s474 = sand.u32 %s252, 1
        %s475 = scalar_lea.sflag [#allocation4], %s474
        %s476 = sand.u32 %s252, 1
        %s477 = smul.addr %s476, 4
        %s478 = scalar_lea.vmem [#allocation10], %s477
        %p479 = pneg %p293
        %p480 = pneg %p290
        %s481 = sand.u32 %s34, 1
        %s482 = scalar_lea.sflag [#allocation12], %s481
        %s483 = sand.u32 %s280, 1
        %s484 = smul.addr %s483, 4
        %s485 = scalar_lea.vmem [#allocation11], %s484
        %p486 = pneg %p321
        %p487 = pneg %p318
        %s488 = sand.u32 %s34, 1
        %s489 = scalar_lea.sflag [#allocation12], %s488
        %s490 = sand.u32 %s308, 1
        %s491 = smul.addr %s490, 4
        %s492 = scalar_lea.vmem [#allocation13], %s491
        %v494 = vld [vmem:[%s428] sm:$0xff]
        %v495 = vld [vmem:[%s7] sm:$0x1]
        %v496 = vld [vmem:[%s8] sm:$0x1]
        %vm497 = vcmask 261120
        %v498 = vsel %vm497, %v494, 0.0
        %499 = vadd.xlane.f32.xlu0 %v498
        %v500 = vpop.xlane.xlu0 %499
        %v501 = vrcp.pop 32.0
        %v502 = vmul.f32 32.0, %v501
        %v503 = vsub.f32 1.0, %v502
        %v504 = vmul.f32 %v501, %v503
        %v505 = vadd.f32 %v501, %v504
        %vm506 = vweird.f32 %v501
        %v507 = vsel %vm506, %v501, %v505
        %v508 = vmul.f32 %v500, %v507
        %v509 = vsub.f32 %v494, %v508
        %v510 = vmul.f32 %v509, %v509
        %v511 = vsel %vm497, %v510, 0.0
        %512 = vadd.xlane.f32.xlu0 %v511
        %v513 = vpop.xlane.xlu0 %512
        %v514 = vmul.f32 %v513, 0.032258064
        %v515 = vrsqrt.pop %v514
        %v516 = vmul.f32 %v515, %v514
        %v517 = vmul.f32 %v516, %v515
        %v518 = vmul.f32 0.5, %v517
        %v519 = vsub.f32 1.5, %v518
        %v520 = vmul.f32 %v515, %v519
        %v521 = vmul.f32 %v514, %v520
        %vm522 = vcmp.eq.f32.partialorder %v514, inf
        %v523 = vsel %vm522, %v514, %v521
        %vm524 = vcmp.eq.f32.partialorder %v514, 0.0
        %v525 = vand.u32 %v514, 2147483648
        %v526 = vsel %vm524, %v525, %v523
        %v527 = vadd.f32 %v526, 1e-06
        %v528 = vrcp.pop %v527
        %v529 = vmul.f32 %v527, %v528
        %v530 = vsub.f32 1.0, %v529
        %v531 = vmul.f32 %v528, %v530
        %v532 = vadd.f32 %v528, %v531
        %vm533 = vweird.f32 %v527
        %vm534 = vweird.f32 %v528
        %vm535 = vmor %vm533, %vm534
        %v536 = vsel %vm535, %v528, %v532
        %v537 = vand.u32 2147483647, %v527
        %vm538 = vcmp.eq.f32.partialorder %v537, 8.507059e+37
        %v539 = vand.u32 %v527, 2147483648
        %v540 = vor.u32 1.1754944e-38, %v539
        %v541 = vsel %vm538, %v540, %v536
        %v542 = vmul.f32 %v509, %v541
        %v544 = vperm.slane %v495, 0
        %v546 = vmul.f32 %v542, %v544
        %v548 = vperm.slane %v496, 0
        %v550 = vadd.f32 %v546, %v548
        %v551 = vpack.c.bf16 %v550, %v550
        %v552 = vld [vmem:[#allocation5] sm:$0xf]
        %v553 = vld [vmem:[#allocation5 + $0x4] sm:$0xf]
        %v554 = vld [vmem:[#allocation5 + $0x8] sm:$0xf]
        %v555 = vld [vmem:[#allocation5 + $0xc] sm:$0xf]
        %v556 = vld [vmem:[%s2] sm:$0x1]
        %v558 = vperm.slane %v556, 0
        %v564 = vunpack.c.l.b16 %v552
        %v565 = vunpack.c.l.b16 %v553
        %v566 = vunpack.c.l.b16 %v554
        %v567 = vunpack.c.l.b16 %v555
        %v568 = vpack.c.b16 %v565, %v564
        %v569 = vpack.c.b16 %v567, %v566
        %v573 = vsel %vm497, %v551, 0
        %575 = vmatpush.bf16.msra.mxu0 0
        %576 = vmatpush.bf16.msra.mxu0 0
        %577 = vmatpush.bf16.msra.mxu0 0
        %578 = vmatpush.bf16.msra.mxu0 0
        %579 = vmatpush.bf16.msra.mxu0 0
        %580 = vmatpush.bf16.msra.mxu0 0
        %581 = vmatpush.bf16.msra.mxu0 %v569
        %582 = vmatpush.bf16.msra.mxu0 %v568
        %583 = vmatmul.bf16.gmra.mxu0 %v573
        %v584 = vpop.f32.mrf.mxu0
        %v585 = vadd.f32 %v558, %v584
        %v586 = vpop.f32.mrf.mxu0
        %587 = vdwg.mxu0
        %v588 = vmul.f32 %v585, 0.35355338
        %v589 = vpack.c.bf16 %v588, %v588
        %vm590 = vcmask 257024
        %591 = vst.msk [vmem:[%s478] sm:$0xf] %vm590, %v589
        %v592 = vld [vmem:[#allocation7] sm:$0xf]
        %v593 = vld [vmem:[#allocation7 + $0x4] sm:$0xf]
        %v594 = vld [vmem:[#allocation7 + $0x8] sm:$0xf]
        %v595 = vld [vmem:[#allocation7 + $0xc] sm:$0xf]
        %v596 = vld [vmem:[%s4] sm:$0x1]
        %v598 = vperm.slane %v596, 0
        %v604 = vunpack.c.l.b16 %v592
        %v605 = vunpack.c.l.b16 %v593
        %v606 = vunpack.c.l.b16 %v594
        %v607 = vunpack.c.l.b16 %v595
        %v608 = vpack.c.b16 %v605, %v604
        %v609 = vpack.c.b16 %v607, %v606
        %612 = vmatpush.bf16.msra.mxu0 0
        %613 = vmatpush.bf16.msra.mxu0 0
        %614 = vmatpush.bf16.msra.mxu0 0
        %615 = vmatpush.bf16.msra.mxu0 0
        %616 = vmatpush.bf16.msra.mxu0 0
        %617 = vmatpush.bf16.msra.mxu0 0
        %618 = vmatpush.bf16.msra.mxu0 %v609
        %619 = vmatpush.bf16.msra.mxu0 %v608
        %620 = vmatmul.bf16.gmra.mxu0 %v573
        %v621 = vpop.f32.mrf.mxu0
        %v622 = vadd.f32 %v598, %v621
        %v623 = vpop.f32.mrf.mxu0
        %624 = vdwg.mxu0
        %v625 = vpack.c.bf16 %v622, %v622
        %626 = vst.msk [vmem:[%s485] sm:$0xf] %vm590, %v625
        %v627 = vld [vmem:[#allocation8] sm:$0xf]
        %v628 = vld [vmem:[#allocation8 + $0x4] sm:$0xf]
        %v629 = vld [vmem:[#allocation8 + $0x8] sm:$0xf]
        %v630 = vld [vmem:[#allocation8 + $0xc] sm:$0xf]
        %v631 = vld [vmem:[%s6] sm:$0x1]
        %v633 = vperm.slane %v631, 0
        %v639 = vunpack.c.l.b16 %v627
        %v640 = vunpack.c.l.b16 %v628
        %v641 = vunpack.c.l.b16 %v629
        %v642 = vunpack.c.l.b16 %v630
        %v643 = vpack.c.b16 %v640, %v639
        %v644 = vpack.c.b16 %v642, %v641
        %647 = vmatpush.bf16.msra.mxu0 0
        %648 = vmatpush.bf16.msra.mxu0 0
        %649 = vmatpush.bf16.msra.mxu0 0
        %650 = vmatpush.bf16.msra.mxu0 0
        %651 = vmatpush.bf16.msra.mxu0 0
        %652 = vmatpush.bf16.msra.mxu0 0
        %653 = vmatpush.bf16.msra.mxu0 %v644
        %654 = vmatpush.bf16.msra.mxu0 %v643
        %655 = vmatmul.bf16.gmra.mxu0 %v573
        %v656 = vpop.f32.mrf.mxu0
        %v657 = vadd.f32 %v633, %v656
        %v658 = vpop.f32.mrf.mxu0
        %659 = vdwg.mxu0
        %v660 = vpack.c.bf16 %v657, %v657
        %661 = vst.msk [vmem:[%s492] sm:$0xf] %vm590, %v660
        %s662 = sand.u32 %s252, 1
        %s663 = scalar_lea.sflag [#allocation4], %s662
        %s664 = sand.u32 %s252, 1
        %s665 = smul.addr %s664, 4
        %s666 = scalar_lea.vmem [#allocation10], %s665
        %s667 = sand.u32 %s34, 1
        %s668 = scalar_lea.sflag [#allocation12], %s667
        %s669 = sand.u32 %s280, 1
        %s670 = smul.addr %s669, 4
        %s671 = scalar_lea.vmem [#allocation11], %s670
        %s672 = sand.u32 %s34, 1
        %s673 = scalar_lea.sflag [#allocation12], %s672
        %s674 = sand.u32 %s308, 1
        %s675 = smul.addr %s674, 4
        %s676 = scalar_lea.vmem [#allocation13], %s675
        // Predicated region
        $region73: #{tpu_custom_call.1} parent=55 // pred_check
          %p677 = pneg %p262
        $region74: #{tpu_custom_call.1} parent=55 // pred_check_branch
          %679 = sbr.rel (%p677) target = $region76
        $region75: #{tpu_custom_call.1} parent=55 // pred_region
          %681 = vsyncadd %s663, 0
          %s682 = sadd.s32 %s39, %s38
          %s683 = smul.addr %s682, 4
          %s684 = scalar_lea.hbm %s9, %s683
          %s686 = sshll.u32 %s666, 4
          %s687 = int_to_ptr.vmem [resolvable:$true] %s686
          %s688 = sshll.u32 %s684, 4
          %s689 = int_to_ptr.hbm [resolvable:$true] %s688
          %691 = dma.vmem_to_hbm [thread:$0]  %s687, 64, %s689, %s663
        $region76: #{tpu_custom_call.1} parent=55 // pred_fallthru
          _
        // Predicated region
        $region77: #{tpu_custom_call.1} parent=55 // pred_check
          %p692 = pneg %p290
        $region78: #{tpu_custom_call.1} parent=55 // pred_check_branch
          %694 = sbr.rel (%p692) target = $region80
        $region79: #{tpu_custom_call.1} parent=55 // pred_region
          %696 = vsyncadd %s668, 0
          %s697 = sadd.s32 %s39, %s38
          %s698 = smul.addr %s697, 4
          %s699 = scalar_lea.hbm %s10, %s698
          %s701 = sshll.u32 %s671, 4
          %s702 = int_to_ptr.vmem [resolvable:$true] %s701
          %s703 = sshll.u32 %s699, 4
          %s704 = int_to_ptr.hbm [resolvable:$true] %s703
          %706 = dma.vmem_to_hbm [thread:$0]  %s702, 64, %s704, %s668
        $region80: #{tpu_custom_call.1} parent=55 // pred_fallthru
          _
        // Predicated region
        $region81: #{tpu_custom_call.1} parent=55 // pred_check
          %p707 = pneg %p318
        $region82: #{tpu_custom_call.1} parent=55 // pred_check_branch
          %709 = sbr.rel (%p707) target = $region84
        $region83: #{tpu_custom_call.1} parent=55 // pred_region
          %711 = vsyncadd %s673, 0
          %s712 = sadd.s32 %s39, %s38
          %s713 = smul.addr %s712, 4
          %s714 = scalar_lea.hbm %s11, %s713
          %s716 = sshll.u32 %s676, 4
          %s717 = int_to_ptr.vmem [resolvable:$true] %s716
          %s718 = sshll.u32 %s714, 4
          %s719 = int_to_ptr.hbm [resolvable:$true] %s718
          %721 = dma.vmem_to_hbm [thread:$0]  %s717, 64, %s719, %s673
        $region84: #{tpu_custom_call.1} parent=55 // pred_fallthru
          _
      $region56: #{tpu_custom_call.1} parent=5 // pred_fallthru
        _
      %p722 = scmp.le.s32.totalorder 2, %s29
      // Predicated region
      $region85: #{tpu_custom_call.1} parent=5 // pred_check
        %p723 = pneg %p722
      $region86: #{tpu_custom_call.1} parent=5 // pred_check_branch
        %725 = sbr.rel (%p723) target = $region88
      $region87: #{tpu_custom_call.1} parent=5 // pred_region
        %s726 = ssub.s32 %s29, 2
        // Predicated region
        $region89: #{tpu_custom_call.1} parent=87 // pred_check
          %p727 = pneg %p268
        $region90: #{tpu_custom_call.1} parent=87 // pred_check_branch
          %729 = sbr.rel (%p727) target = $region92
        $region91: #{tpu_custom_call.1} parent=87 // pred_region
          %s730 = sand.u32 %s253, 1
          %s731 = scalar_lea.sflag [#allocation4], %s730
          %s732 = sand.u32 %s253, 1
          %s733 = smul.addr %s732, 4
          %s734 = scalar_lea.vmem [#allocation10], %s733
          %736 = dma.done %s731, 64
        $region92: #{tpu_custom_call.1} parent=87 // pred_fallthru
          _
        // Predicated region
        $region93: #{tpu_custom_call.1} parent=87 // pred_check
          %p737 = pneg %p296
        $region94: #{tpu_custom_call.1} parent=87 // pred_check_branch
          %739 = sbr.rel (%p737) target = $region96
        $region95: #{tpu_custom_call.1} parent=87 // pred_region
          %s740 = sand.u32 %s35, 1
          %s741 = scalar_lea.sflag [#allocation12], %s740
          %s742 = sand.u32 %s281, 1
          %s743 = smul.addr %s742, 4
          %s744 = scalar_lea.vmem [#allocation11], %s743
          %746 = dma.done %s741, 64
        $region96: #{tpu_custom_call.1} parent=87 // pred_fallthru
          _
        // Predicated region
        $region97: #{tpu_custom_call.1} parent=87 // pred_check
          %p747 = pneg %p324
        $region98: #{tpu_custom_call.1} parent=87 // pred_check_branch
          %749 = sbr.rel (%p747) target = $region100
        $region99: #{tpu_custom_call.1} parent=87 // pred_region
          %s750 = sand.u32 %s35, 1
          %s751 = scalar_lea.sflag [#allocation12], %s750
          %s752 = sand.u32 %s309, 1
          %s753 = smul.addr %s752, 4
          %s754 = scalar_lea.vmem [#allocation13], %s753
          %756 = dma.done %s751, 64
        $region100: #{tpu_custom_call.1} parent=87 // pred_fallthru
          _
      $region88: #{tpu_custom_call.1} parent=5 // pred_fallthru
        _
    $region6: #{tpu_custom_call.1} parent=1 // loop_footer
      %s33 = sadd.s32 1, %s29
    $region7: #{tpu_custom_call.1} parent=1 // loop_footer_branch
      %28 = sbr.rel target = $region3
    $region8: #{tpu_custom_call.1} parent=1 // loop_exit
      _
    %757 = vsyncpa [#allocation3], 1
    %s758 = scalar_lea.sflag [#allocation3], 1
    %759 = vsyncpa %s758, 1
    %760 = vsyncpa [#allocation6], 1
    %761 = vsyncpa [#allocation9], 1
    %762 = vsyncpa [#allocation4], 1
    %s763 = scalar_lea.sflag [#allocation4], 1
    %764 = vsyncpa %s763, 1
    %765 = vsyncpa [#allocation12], 1
    %s766 = scalar_lea.sflag [#allocation12], 1
    %767 = vsyncpa %s766, 1

</llo_original>
